<compile_context>
chip_gen: v5e
topology: v5e:2x2
jax: 0.10.0
libtpu: 0.0.40
codegen_flags: <defaults>
</compile_context>

<pallas_src>
from functools import partial

import jax
import jax.numpy as jnp
from jax.experimental import pallas as pl
from jax.experimental.pallas import tpu as pltpu

BN_EPS = 1e-5
LANE = 128


def _round_up(n, m):
    return ((n + m - 1) // m) * m


def _mlp_kernel(x_ref, w1_ref, gamma_ref, beta_ref, w2_ref, b2_ref, o_ref):
    # x: (B, IN) bf16   w1: (IN, H_P) bf16   gamma/beta: (1, H_P) f32
    # w2: (H_P, O_P) bf16   b2: (1, O_P) f32   o: (B, O_P) f32
    #
    # Linear 1: bf16 MXU matmul, f32 accumulate. No bias -- exactly cancelled by the
    # train-mode BatchNorm batch-mean subtraction.
    h = jnp.dot(x_ref[...], w1_ref[...], preferred_element_type=jnp.float32)

    # BatchNorm1d (training-mode: batch mean + biased batch variance), all in f32.
    # gamma * rsqrt(var + eps) is folded into a single per-column scale.
    mean = jnp.mean(h, axis=0, keepdims=True)
    centered = h - mean
    var = jnp.mean(centered * centered, axis=0, keepdims=True)
    scale = gamma_ref[...] * jax.lax.rsqrt(var + BN_EPS)
    h_act = jnp.maximum(centered * scale + beta_ref[...], 0.0)  # affine + ReLU (f32)

    # Linear 2: cast activations to bf16 for the MXU, accumulate in f32, lane-dense
    # padded output, bias added in f32.
    o_ref[...] = (
        jnp.dot(h_act.astype(w2_ref.dtype), w2_ref[...],
                preferred_element_type=jnp.float32)
        + b2_ref[...]
    )


def prepare_params(params):
    """One-time parameter prep (pad to 128 lanes, transpose, cast MXU operands to bf16).

    Call once at init / param update time; NOT on the per-forward path.
    Returns (w1t, gamma_p, beta_p, w2t, b2_p).
    """
    w1, b1, gamma, beta, w2, b2 = params
    del b1  # exactly cancelled by train-mode BatchNorm mean subtraction
    hidden, input_size = w1.shape
    out_size = w2.shape[0]
    hid_p = _round_up(hidden, LANE)
    out_p = _round_up(out_size, LANE)

    # Zero padding is exact: padded hidden cols of w1t are zero -> h=0 there, gamma is
    # zero-padded -> normalized value 0 -> hits zero rows of w2t; padded output cols are
    # b2=0 and either sliced off or ignored by the consumer.
    w1t = (
        jnp.zeros((input_size, hid_p), jnp.bfloat16)
        .at[:, :hidden].set(w1.T.astype(jnp.bfloat16))
    )
    gamma_p = jnp.zeros((1, hid_p), jnp.float32).at[:, :hidden].set(gamma)
    beta_p = jnp.zeros((1, hid_p), jnp.float32).at[:, :hidden].set(beta)
    w2t = (
        jnp.zeros((hid_p, out_p), jnp.bfloat16)
        .at[:hidden, :out_size].set(w2.T.astype(jnp.bfloat16))
    )
    b2_p = jnp.zeros((1, out_p), jnp.float32).at[:, :out_size].set(b2)
    return (w1t, gamma_p, beta_p, w2t, b2_p)


@partial(jax.jit, static_argnames=("input_size", "out_size", "slice_output"))
def neural_network_forward(x, prepped, *, input_size, out_size, slice_output=True):
    """Mirrors NeuralNetwork.forward: flatten to (-1, input_size), Linear-BN-ReLU-Linear.

    `prepped` comes from `prepare_params` (done once, outside this call path).
    With slice_output=False the lane-dense padded (B, out_p) slab is returned, skipping
    the post-call slice copy.
    """
    w1t, gamma_p, beta_p, w2t, b2_p = prepped
    # Per-call data prep is just reshape + bf16 cast of x (no padding: K is unpadded and
    # the batch dim is never padded, so BN batch statistics stay exact).
    x2 = x.reshape(-1, input_size).astype(jnp.bfloat16)
    batch = x2.shape[0]
    out_p = w2t.shape[1]

    vmem_spec = pl.BlockSpec(memory_space=pltpu.MemorySpace.VMEM)
    out_padded = pl.pallas_call(
        _mlp_kernel,
        out_shape=jax.ShapeDtypeStruct((batch, out_p), jnp.float32),
        in_specs=[vmem_spec] * 6,
        out_specs=vmem_spec,
    )(x2, w1t, gamma_p, beta_p, w2t, b2_p)

    if slice_output:
        return out_padded[:, :out_size]
    return out_padded


def init_params(key, input_size, hidden_size, output_size):
    """Deterministic synthetic parameters (PyTorch shapes: weight = (out, in))."""
    k1, k2, k3, k4 = jax.random.split(key, 4)
    s1 = 1.0 / jnp.sqrt(input_size)
    s2 = 1.0 / jnp.sqrt(hidden_size)
    w1 = jax.random.uniform(k1, (hidden_size, input_size), jnp.float32, -s1, s1)
    b1 = jax.random.uniform(k2, (1, hidden_size), jnp.float32, -s1, s1)
    gamma = jnp.ones((1, hidden_size), jnp.float32)   # BatchNorm1d weight init
    beta = jnp.zeros((1, hidden_size), jnp.float32)   # BatchNorm1d bias init
    w2 = jax.random.uniform(k3, (output_size, hidden_size), jnp.float32, -s2, s2)
    b2 = jax.random.uniform(k4, (1, output_size), jnp.float32, -s2, s2)
    return (w1, b1, gamma, beta, w2, b2)


def _reference_forward(x, params, input_size, mxu_dtype=jnp.float32):
    """Pure-JAX reference (keeps b1, which train-mode BatchNorm cancels).

    mxu_dtype=jnp.bfloat16 reproduces the kernel's reduced-precision matmul operands.
    """
    x = x.astype(jnp.float32).reshape(-1, input_size)
    w1, b1, gamma, beta, w2, b2 = params
    h = jnp.dot(x.astype(mxu_dtype), w1.T.astype(mxu_dtype),
                preferred_element_type=jnp.float32) + b1
    mean = jnp.mean(h, axis=0, keepdims=True)
    var = jnp.mean((h - mean) ** 2, axis=0, keepdims=True)
    h = (h - mean) / jnp.sqrt(var + BN_EPS) * gamma + beta
    h = jnp.maximum(h, 0.0)
    return jnp.dot(h.astype(mxu_dtype), w2.T.astype(mxu_dtype),
                   preferred_element_type=jnp.float32) + b2


if __name__ == "__main__":
    input_size, hidden_size, output_size = 16, 32, 8

    key = jax.random.PRNGKey(0)
    k_param, k_x = jax.random.split(key)
    params = init_params(k_param, input_size, hidden_size, output_size)
    prepped = prepare_params(params)           # one-time, outside the per-call path
    prepped = jax.block_until_ready(prepped)

    # Input: (2, 4, 16) -> forward views it as (8, 16)
    x = jax.random.normal(k_x, (2, 4, input_size), dtype=jnp.float32)

    logits = neural_network_forward(
        x, prepped, input_size=input_size, out_size=output_size)
    logits = jax.block_until_ready(logits)
    assert logits.shape == (8, output_size)

    # Tight check against a reference using the same bf16 MXU-operand precision.
    ref_bf16 = _reference_forward(x, params, input_size, mxu_dtype=jnp.bfloat16)
    assert jnp.allclose(logits, ref_bf16, atol=1e-3, rtol=1e-3)

    # Loose check against the full-f32 reference (bounds the bf16 operand error).
    ref_f32 = _reference_forward(x, params, input_size, mxu_dtype=jnp.float32)
    assert jnp.allclose(logits, ref_f32, atol=5e-2, rtol=5e-2)

    # Padded-slab path (skips the post-call slice copy) must agree on the real columns.
    slab = neural_network_forward(
        x, prepped, input_size=input_size, out_size=output_size, slice_output=False)
    slab = jax.block_until_ready(slab)
    assert jnp.allclose(slab[:, :output_size], logits)

    print("KERNEL_OK")
</pallas_src>

<mosaic_0001>
module attributes {stable_mosaic.version = 11 : i64} {
  func.func @_mlp_kernel(%arg0: memref<8x16xbf16, #tpu.memory_space<vmem>>, %arg1: memref<16x128xbf16, #tpu.memory_space<vmem>>, %arg2: memref<1x128xf32, #tpu.memory_space<vmem>>, %arg3: memref<1x128xf32, #tpu.memory_space<vmem>>, %arg4: memref<128x128xbf16, #tpu.memory_space<vmem>>, %arg5: memref<1x128xf32, #tpu.memory_space<vmem>>, %arg6: memref<8x128xf32, #tpu.memory_space<vmem>>) attributes {dimension_semantics = [], scalar_prefetch = 0 : i64, scratch_operands = 0 : i64, tpu.core_type = #tpu.core_type<tc>} {
    %c0 = arith.constant 0 : index
    %c0_0 = arith.constant 0 : index
    %0 = vector.load %arg0[%c0, %c0_0] : memref<8x16xbf16, #tpu.memory_space<vmem>>, vector<8x16xbf16>
    %c0_1 = arith.constant 0 : index
    %c0_2 = arith.constant 0 : index
    %1 = vector.load %arg1[%c0_1, %c0_2] : memref<16x128xbf16, #tpu.memory_space<vmem>>, vector<16x128xbf16>
    %cst = arith.constant dense<0.000000e+00> : vector<8x128xf32>
    %2 = tpu.matmul %0, %1, %cst {dimension_numbers = #tpu.dot_dimension_numbers<[1], [0], [0], [1], [0, 0, 1, 1], [], []>} : vector<8x16xbf16>, vector<16x128xbf16>, vector<8x128xf32> -> vector<8x128xf32>
    %cst_3 = arith.constant dense<0.000000e+00> : vector<128xf32>
    %3 = vector.multi_reduction <add>, %2, %cst_3 [0] : vector<8x128xf32> to vector<128xf32>
    %4 = vector.shape_cast %3 : vector<128xf32> to vector<1x128xf32>
    %cst_4 = arith.constant 8.000000e+00 : f32
    %5 = vector.broadcast %cst_4 : f32 to vector<1x128xf32>
    %6 = arith.divf %4, %5 : vector<1x128xf32>
    %7 = vector.broadcast %6 : vector<1x128xf32> to vector<8x128xf32>
    %8 = arith.subf %2, %7 : vector<8x128xf32>
    %9 = arith.mulf %8, %8 : vector<8x128xf32>
    %cst_5 = arith.constant dense<0.000000e+00> : vector<128xf32>
    %10 = vector.multi_reduction <add>, %9, %cst_5 [0] : vector<8x128xf32> to vector<128xf32>
    %11 = vector.shape_cast %10 : vector<128xf32> to vector<1x128xf32>
    %cst_6 = arith.constant 8.000000e+00 : f32
    %12 = vector.broadcast %cst_6 : f32 to vector<1x128xf32>
    %13 = arith.divf %11, %12 : vector<1x128xf32>
    %c0_7 = arith.constant 0 : index
    %c0_8 = arith.constant 0 : index
    %14 = vector.load %arg2[%c0_7, %c0_8] : memref<1x128xf32, #tpu.memory_space<vmem>>, vector<1x128xf32>
    %cst_9 = arith.constant 9.99999974E-6 : f32
    %15 = vector.broadcast %cst_9 : f32 to vector<1x128xf32>
    %16 = arith.addf %13, %15 : vector<1x128xf32>
    %17 = math.rsqrt %16 : vector<1x128xf32>
    %18 = arith.mulf %14, %17 : vector<1x128xf32>
    %19 = vector.broadcast %18 : vector<1x128xf32> to vector<8x128xf32>
    %20 = arith.mulf %8, %19 : vector<8x128xf32>
    %c0_10 = arith.constant 0 : index
    %c0_11 = arith.constant 0 : index
    %21 = vector.load %arg3[%c0_10, %c0_11] : memref<1x128xf32, #tpu.memory_space<vmem>>, vector<1x128xf32>
    %22 = vector.broadcast %21 : vector<1x128xf32> to vector<8x128xf32>
    %23 = arith.addf %20, %22 : vector<8x128xf32>
    %cst_12 = arith.constant 0.000000e+00 : f32
    %24 = vector.broadcast %cst_12 : f32 to vector<8x128xf32>
    %25 = arith.maximumf %23, %24 : vector<8x128xf32>
    %26 = arith.truncf %25 : vector<8x128xf32> to vector<8x128xbf16>
    %c0_13 = arith.constant 0 : index
    %c0_14 = arith.constant 0 : index
    %27 = vector.load %arg4[%c0_13, %c0_14] : memref<128x128xbf16, #tpu.memory_space<vmem>>, vector<128x128xbf16>
    %cst_15 = arith.constant dense<0.000000e+00> : vector<8x128xf32>
    %28 = tpu.matmul %26, %27, %cst_15 {dimension_numbers = #tpu.dot_dimension_numbers<[1], [0], [0], [1], [0, 0, 1, 1], [], []>} : vector<8x128xbf16>, vector<128x128xbf16>, vector<8x128xf32> -> vector<8x128xf32>
    %c0_16 = arith.constant 0 : index
    %c0_17 = arith.constant 0 : index
    %29 = vector.load %arg5[%c0_16, %c0_17] : memref<1x128xf32, #tpu.memory_space<vmem>>, vector<1x128xf32>
    %30 = vector.broadcast %29 : vector<1x128xf32> to vector<8x128xf32>
    %31 = arith.addf %28, %30 : vector<8x128xf32>
    %c0_18 = arith.constant 0 : index
    %c0_19 = arith.constant 0 : index
    %32 = vector.load %arg6[%c0_18, %c0_19] : memref<8x128xf32, #tpu.memory_space<vmem>>, vector<8x128xf32>
    tpu.vector_store %arg6[%c0_18, %c0_19], %31 {strides = array<i32>} : memref<8x128xf32, #tpu.memory_space<vmem>>, vector<8x128xf32>,
    return
  }
}

</mosaic_0001>

<llo_original>
// kernel: neural_network_forward.1
$region0: #{neural_network_forward.1}
  #allocation0 [shape = 'u32[]', space=smem, size = 0x4, offset = 0x4, fixed_abs, tag = 'smem constant byte address 0x4 - core index']
  #allocation1 [shape = 'u32[72,128]{1,0:T(1,128)}', space=vmem, size = 0x9000, scoped, tag = 'internal scratch']
  %s0 = inlined_call_operand.vmem [shape: bf16[8,16], index: 0, kind: input, shape index: {}]
  %s1 = inlined_call_operand.vmem [shape: bf16[16,128], index: 1, kind: input, shape index: {}]
  %s2 = inlined_call_operand.vmem [shape: f32[1,128], index: 2, kind: input, shape index: {}]
  %s3 = inlined_call_operand.vmem [shape: f32[1,128], index: 3, kind: input, shape index: {}]
  %s4 = inlined_call_operand.hbm [shape: bf16[128,128], index: 4, kind: input, shape index: {}]
  %s5 = inlined_call_operand.vmem [shape: f32[1,128], index: 5, kind: input, shape index: {}]
  %s6 = inlined_call_operand.hbm [shape: f32[8,128], index: 6, kind: output, shape index: {}]
  %s7 = sld [smem:[#allocation0]]
  $region38: #{neural_network_forward.1} parent=0
    _
  %s9 = ssub.s32 1, %s7
  %s10 = scalar_select 0, %s9, %s7
  $region1: #{neural_network_forward.1} parent=0
    #allocation2 [shape = 'u8[32768]{0}', space=vmem, size = 0x8000, scoped, tag = 'input window, operand 4, single buffered']
    #allocation3 [shape = 's32[1]{0}', space=sflag, size = 0x4, scoped, tag = 'scoped memory for neural_network_forward.1']
    #allocation4 [shape = 's32[1]{0}', space=sflag, size = 0x4, scoped, tag = 'scoped memory for neural_network_forward.1']
    #allocation5 [shape = 'u8[4096]{0}', space=vmem, size = 0x1000, scoped, tag = 'output window, operand 0, single buffered']
    %11 = vsyncpa [#allocation3], 0
    %12 = vsyncpa [#allocation4], 0
    // Predicated region
    $region2: #{neural_network_forward.1} parent=1 // pred_check
      _
    $region3: #{neural_network_forward.1} parent=1 // pred_check_branch
      %14 = sbr.rel (0) target = $region5
    $region4: #{neural_network_forward.1} parent=1 // pred_region
      _
    $region5: #{neural_network_forward.1} parent=1 // pred_fallthru
      _
    // Predicated region
    $region6: #{neural_network_forward.1} parent=1 // pred_check
      _
    $region7: #{neural_network_forward.1} parent=1 // pred_check_branch
      %16 = sbr.rel (0) target = $region9
    $region8: #{neural_network_forward.1} parent=1 // pred_region
      _
    $region9: #{neural_network_forward.1} parent=1 // pred_fallthru
      _
    // Predicated region
    $region10: #{neural_network_forward.1} parent=1 // pred_check
      _
    $region11: #{neural_network_forward.1} parent=1 // pred_check_branch
      %18 = sbr.rel (0) target = $region13
    $region12: #{neural_network_forward.1} parent=1 // pred_region
      _
    $region13: #{neural_network_forward.1} parent=1 // pred_fallthru
      _
    // Predicated region
    $region14: #{neural_network_forward.1} parent=1 // pred_check
      _
    $region15: #{neural_network_forward.1} parent=1 // pred_check_branch
      %20 = sbr.rel (0) target = $region17
    $region16: #{neural_network_forward.1} parent=1 // pred_region
      _
    $region17: #{neural_network_forward.1} parent=1 // pred_fallthru
      _
    // Predicated region
    $region18: #{neural_network_forward.1} parent=1 // pred_check
      _
    $region19: #{neural_network_forward.1} parent=1 // pred_check_branch
      %22 = sbr.rel (0) target = $region21
    $region20: #{neural_network_forward.1} parent=1 // pred_region
      %24 = vsyncadd [#allocation3], 0
      %s25 = sshll.u32 %s4, 4
      %s26 = int_to_ptr.hbm [resolvable:$true] %s25
      %s27 = sshll.u32 [#allocation2], 4
      %s28 = int_to_ptr.vmem [resolvable:$true] %s27
      %33 = dma.hbm_to_vmem [thread:$0]  %s26, 1024, %s28, [#allocation3], 64, 64, 4
    $region21: #{neural_network_forward.1} parent=1 // pred_fallthru
      _
    // Predicated region
    $region22: #{neural_network_forward.1} parent=1 // pred_check
      _
    $region23: #{neural_network_forward.1} parent=1 // pred_check_branch
      %35 = sbr.rel (0) target = $region25
    $region24: #{neural_network_forward.1} parent=1 // pred_region
      _
    $region25: #{neural_network_forward.1} parent=1 // pred_fallthru
      _
    // Predicated region
    $region26: #{neural_network_forward.1} parent=1 // pred_check
      _
    $region27: #{neural_network_forward.1} parent=1 // pred_check_branch
      %37 = sbr.rel (0) target = $region29
    $region28: #{neural_network_forward.1} parent=1 // pred_region
      %39 = dma.done [#allocation3], 1024
    $region29: #{neural_network_forward.1} parent=1 // pred_fallthru
      _
    %v41 = vld [vmem:[%s0] sm:$0xf]
    %v42 = vld [vmem:[%s1] sm:$0xf]
    %v43 = vld [vmem:[%s1 + $0x4] sm:$0xf]
    %v46 = vunpack.c.l.b16 %v42
    %v47 = vunpack.c.l.b16 %v43
    %v48 = vpack.c.b16 %v47, %v46
    %vm50 = vcmask 130048
    %v52 = vsel %vm50, %v41, 0
    %54 = vmatpush.bf16.msra.mxu0 0
    %55 = vmatpush.bf16.msra.mxu0 0
    %56 = vmatpush.bf16.msra.mxu0 0
    %57 = vmatpush.bf16.msra.mxu0 0
    %58 = vmatpush.bf16.msra.mxu0 0
    %59 = vmatpush.bf16.msra.mxu0 0
    %60 = vmatpush.bf16.msra.mxu0 0
    %61 = vmatpush.bf16.msra.mxu0 %v48
    %62 = vmatmul.bf16.gmra.mxu0 %v52
    %v63 = vpop.f32.mrf.mxu0
    %v64 = vadd.f32 0.0, %v63
    %v65 = vpop.f32.mrf.mxu0
    %66 = vdwg.mxu0
    %v67 = vrot.slane %v64, 4
    %v68 = vadd.f32 %v64, %v67
    %v69 = vrot.slane %v68, 2
    %v70 = vadd.f32 %v68, %v69
    %v71 = vrot.slane %v70, 1
    %v72 = vadd.f32 %v70, %v71
    %v73 = vrcp.pop 8.0
    %v74 = vmul.f32 8.0, %v73
    %v75 = vsub.f32 1.0, %v74
    %v76 = vmul.f32 %v73, %v75
    %v77 = vadd.f32 %v73, %v76
    %vm78 = vweird.f32 %v73
    %v79 = vsel %vm78, %v73, %v77
    %v80 = vmul.f32 %v72, %v79
    %v81 = vsub.f32 %v64, %v80
    %v82 = vmul.f32 %v81, %v81
    %v83 = vrot.slane %v82, 4
    %v84 = vadd.f32 %v82, %v83
    %v85 = vrot.slane %v84, 2
    %v86 = vadd.f32 %v84, %v85
    %v87 = vrot.slane %v86, 1
    %v88 = vadd.f32 %v86, %v87
    %v89 = vmul.f32 %v88, %v79
    %v90 = vld [vmem:[%s2] sm:$0x1]
    %v91 = vadd.f32 %v89, 1e-05
    %v92 = vrsqrt.pop %v91
    %v93 = vmul.f32 %v92, %v91
    %v94 = vmul.f32 %v93, %v92
    %v95 = vmul.f32 0.5, %v94
    %v96 = vsub.f32 1.5, %v95
    %v97 = vmul.f32 %v92, %v96
    %vm98 = vweird.f32 %v91
    %vm99 = vweird.f32 %v92
    %vm100 = vmor %vm98, %vm99
    %v101 = vsel %vm100, %v92, %v97
    %v102 = vmul.f32 %v90, %v101
    %v104 = vperm.slane %v102, 0
    %v106 = vmul.f32 %v81, %v104
    %v107 = vld [vmem:[%s3] sm:$0x1]
    %v109 = vperm.slane %v107, 0
    %v111 = vadd.f32 %v106, %v109
    %v112 = vmax.f32 %v111, 0.0
    %v113 = vpack.c.bf16 %v112, %v112
    %v114 = vld [vmem:[#allocation2] sm:$0xf]
    %v115 = vld [vmem:[#allocation2 + $0x4] sm:$0xf]
    %v116 = vld [vmem:[#allocation2 + $0x8] sm:$0xf]
    %v117 = vld [vmem:[#allocation2 + $0xc] sm:$0xf]
    %v118 = vld [vmem:[#allocation2 + $0x10] sm:$0xf]
    %v119 = vld [vmem:[#allocation2 + $0x14] sm:$0xf]
    %v120 = vld [vmem:[#allocation2 + $0x18] sm:$0xf]
    %v121 = vld [vmem:[#allocation2 + $0x1c] sm:$0xf]
    %v122 = vld [vmem:[#allocation2 + $0x20] sm:$0xf]
    %v123 = vld [vmem:[#allocation2 + $0x24] sm:$0xf]
    %v124 = vld [vmem:[#allocation2 + $0x28] sm:$0xf]
    %v125 = vld [vmem:[#allocation2 + $0x2c] sm:$0xf]
    %v126 = vld [vmem:[#allocation2 + $0x30] sm:$0xf]
    %v127 = vld [vmem:[#allocation2 + $0x34] sm:$0xf]
    %v128 = vld [vmem:[#allocation2 + $0x38] sm:$0xf]
    %v129 = vld [vmem:[#allocation2 + $0x3c] sm:$0xf]
    %v130 = vld [vmem:[%s5] sm:$0x1]
    %v132 = vperm.slane %v130, 0
    %v150 = vunpack.c.l.b16 %v114
    %v151 = vunpack.c.l.b16 %v115
    %v152 = vunpack.c.l.b16 %v116
    %v153 = vunpack.c.l.b16 %v117
    %v154 = vunpack.c.l.b16 %v118
    %v155 = vunpack.c.l.b16 %v119
    %v156 = vunpack.c.l.b16 %v120
    %v157 = vunpack.c.l.b16 %v121
    %v158 = vunpack.c.l.b16 %v122
    %v159 = vunpack.c.l.b16 %v123
    %v160 = vunpack.c.l.b16 %v124
    %v161 = vunpack.c.l.b16 %v125
    %v162 = vunpack.c.l.b16 %v126
    %v163 = vunpack.c.l.b16 %v127
    %v164 = vunpack.c.l.b16 %v128
    %v165 = vunpack.c.l.b16 %v129
    %v166 = vpack.c.b16 %v151, %v150
    %v167 = vpack.c.b16 %v153, %v152
    %v168 = vpack.c.b16 %v155, %v154
    %v169 = vpack.c.b16 %v157, %v156
    %v170 = vpack.c.b16 %v159, %v158
    %v171 = vpack.c.b16 %v161, %v160
    %v172 = vpack.c.b16 %v163, %v162
    %v173 = vpack.c.b16 %v165, %v164
    %182 = vmatpush.bf16.msra.mxu0 %v173
    %183 = vmatpush.bf16.msra.mxu0 %v172
    %184 = vmatpush.bf16.msra.mxu0 %v171
    %185 = vmatpush.bf16.msra.mxu0 %v170
    %186 = vmatpush.bf16.msra.mxu0 %v169
    %187 = vmatpush.bf16.msra.mxu0 %v168
    %188 = vmatpush.bf16.msra.mxu0 %v167
    %189 = vmatpush.bf16.msra.mxu0 %v166
    %190 = vmatmul.bf16.gmra.mxu0 %v113
    %v191 = vpop.f32.mrf.mxu0
    %v192 = vadd.f32 %v132, %v191
    %v193 = vpop.f32.mrf.mxu0
    %194 = vdwg.mxu0
    %195 = vst [vmem:[#allocation5] sm:$0xff] %v192
    // Predicated region
    $region30: #{neural_network_forward.1} parent=1 // pred_check
      _
    $region31: #{neural_network_forward.1} parent=1 // pred_check_branch
      %197 = sbr.rel (0) target = $region33
    $region32: #{neural_network_forward.1} parent=1 // pred_region
      %199 = vsyncadd [#allocation4], 0
      %s201 = sshll.u32 [#allocation5], 4
      %s202 = int_to_ptr.vmem [resolvable:$true] %s201
      %s203 = sshll.u32 %s6, 4
      %s204 = int_to_ptr.hbm [resolvable:$true] %s203
      %206 = dma.vmem_to_hbm [thread:$0]  %s202, 128, %s204, [#allocation4]
    $region33: #{neural_network_forward.1} parent=1 // pred_fallthru
      _
    // Predicated region
    $region34: #{neural_network_forward.1} parent=1 // pred_check
      _
    $region35: #{neural_network_forward.1} parent=1 // pred_check_branch
      %208 = sbr.rel (0) target = $region37
    $region36: #{neural_network_forward.1} parent=1 // pred_region
      %210 = dma.done [#allocation4], 128
    $region37: #{neural_network_forward.1} parent=1 // pred_fallthru
      _
    %211 = vsyncpa [#allocation3], 1
    %212 = vsyncpa [#allocation4], 1

</llo_original>
